<compile_context>
chip_gen: v7x
topology: tpu7x:2x2x1
jax: 0.10.0
libtpu: 0.0.40
codegen_flags: <defaults>
</compile_context>

<pallas_src>
import functools
import math

import numpy as np
import jax
import jax.numpy as jnp
from jax.experimental import pallas as pl
from jax.experimental.pallas import tpu as pltpu

# ---------------- config consistent with the PyTorch module ----------------
DIM = 8                 # base channel dim
DEPTH = 2               # number of ResnetBlocks in self.res
C_IMG = 1               # channels of each of the 4 input images
IN_CH = 4 * C_IMG       # init_conv input channels (after torch.cat on dim=1)
OUT_DIM = C_IMG         # final_conv output channels
TIME_DIM = DIM * 4
B = 2
H = W = 16
BN_EPS = 1e-5

# ---------------- fused-kernel layout constants ----------------
CMAX = DIM                    # channel rows carried through the kernel (sublanes)
SPH, SPW = H + 2, W + 2       # zero-padded spatial (18, 18)
SPAD = SPH * SPW              # 324 flattened padded pixels per image
SPB = 384                     # per-batch lane stride (multiple of 128)
REG = B * SPB                 # 768 lanes; NO halo (rolls wrap, pads/gaps stay 0)
NVALID = float(B * H * W)     # positions entering the BatchNorm statistics
NBLK = DEPTH + 1              # res blocks + final_res_block
NCONV = 1 + 2 * NBLK + 1      # init + 2 per block + final  (= 8)
TAP_OFF = [(dh - 1) * SPW + (dw - 1) for dh in range(3) for dw in range(3)]


# ---------------------------- the fused kernel -----------------------------
def _pred_resnet_kernel(x_ref, m_ref, wc_ref, bc_ref, a1_ref, c1_ref,
                        a2_ref, c2_ref, o_ref, r_buf, x_buf, h_buf, p_buf):
    mask = m_ref[...]                              # (CMAX, REG), 1 on valid pixels

    def conv(src_ref, idx):
        """3x3 / stride 1 / pad 1 conv on the channels-first padded layout.

        src_ref: (CMAX, REG) activation buffer with zeroed pad/gap columns.
        Returns (CMAX, REG) f32 (bias added; invalid lanes hold junk that the
        callers mask away).
        """
        xfull = src_ref[...]                       # (CMAX, REG)
        for t, off in enumerate(TAP_OFF):          # stream 9 rolled taps into
            if off == 0:                           # the shared im2col scratch
                p_buf[pl.ds(t * CMAX, CMAX), :] = xfull
            else:
                p_buf[pl.ds(t * CMAX, CMAX), :] = pltpu.roll(
                    xfull, (-off) % REG, axis=1)
        y = jnp.dot(wc_ref[idx], p_buf[...],       # single K=72 MXU matmul
                    preferred_element_type=jnp.float32)
        return y + bc_ref[idx]

    def bn_affine(y, a, c):
        """Training-mode BatchNorm2d (one-pass stats) + fused affine.

        `a`/`c` may already contain the folded FiLM scale/shift (norm_1) or
        just gamma/beta (norm_2)."""
        ym = y * mask
        s1 = jnp.sum(ym, axis=1, keepdims=True)
        s2 = jnp.sum(ym * ym, axis=1, keepdims=True)
        mean = s1 * (1.0 / NVALID)
        var = s2 * (1.0 / NVALID) - mean * mean    # biased variance (one pass)
        inv = jax.lax.rsqrt(var + BN_EPS)
        return (ym - mean) * (inv * a) + c

    def resnet_block(src_ref, dst_ref, blk):
        # proj_1 -> norm_1 (+ folded FiLM scale/shift) -> ReLU
        h = bn_affine(conv(src_ref, 1 + 2 * blk), a1_ref[blk], c1_ref[blk])
        h_buf[...] = jnp.maximum(h, 0.0) * mask
        # proj_2 -> norm_2 -> + residual (res_conv == Identity: dim == dim_out)
        h2 = bn_affine(conv(h_buf, 2 + 2 * blk), a2_ref[blk], c2_ref[blk])
        dst_ref[...] = (h2 + src_ref[...]) * mask

    # init_conv ; r = x.clone()   (every write is full-width + masked, so no
    # scratch zero-init is needed: pad/gap lanes are rewritten to 0 each layer)
    r_buf[...] = conv(x_ref, 0) * mask

    # self.res blocks (block 0 reads r and writes x_buf so r survives)
    resnet_block(r_buf, x_buf, 0)
    for blk in range(1, DEPTH):
        resnet_block(x_buf, x_buf, blk)

    # x = x + r   (long skip; both operands already masked)
    x_buf[...] = x_buf[...] + r_buf[...]

    # final_res_block ; final_conv (full 8-sublane lane-dense output tile)
    resnet_block(x_buf, x_buf, DEPTH)
    o_ref[...] = conv(x_buf, NCONV - 1)


def _fused_forward(xp, mask, wc, bc, a1, c1, a2, c2):
    return pl.pallas_call(
        _pred_resnet_kernel,
        out_shape=jax.ShapeDtypeStruct((CMAX, REG), jnp.float32),
        scratch_shapes=[pltpu.VMEM((CMAX, REG), jnp.float32),      # r_buf
                        pltpu.VMEM((CMAX, REG), jnp.float32),      # x_buf
                        pltpu.VMEM((CMAX, REG), jnp.float32),      # h_buf
                        pltpu.VMEM((9 * CMAX, REG), jnp.float32)], # im2col patches
        compiler_params=pltpu.CompilerParams(vmem_limit_bytes=4 * 1024 * 1024),
    )(xp, mask, wc, bc, a1, c1, a2, c2)


# ----------------------- roll-direction probe (cached) ----------------------
@functools.lru_cache(maxsize=1)
def _roll_is_numpy_like():
    """True if pltpu.roll matches np.roll semantics (result[i] = x[i - shift])."""
    def k(x_ref, o_ref):
        o_ref[...] = pltpu.roll(x_ref[...], 3, axis=1)
    x = np.arange(8 * 256, dtype=np.float32).reshape(8, 256)
    y = np.asarray(jax.device_get(
        pl.pallas_call(k, out_shape=jax.ShapeDtypeStruct((8, 256), jnp.float32)
                       )(jnp.asarray(x))))
    if np.array_equal(y, np.roll(x, 3, axis=1)):
        return True
    if np.array_equal(y, np.roll(x, -3, axis=1)):
        return False
    raise RuntimeError("unexpected pltpu.roll semantics")


# ------------------------------ glue / packing ------------------------------
def _build_mask():
    m2 = np.zeros((SPH, SPW), np.float32)
    m2[1:1 + H, 1:1 + W] = 1.0
    row = np.zeros((SPB,), np.float32)
    row[:SPAD] = m2.reshape(-1)
    return np.ascontiguousarray(
        np.broadcast_to(np.tile(row, B)[None, :], (CMAX, REG)))


def _pack_conv(w_hwio, bias, roll_numpy_like):
    """(3,3,Cin,Cout) HWIO + (Cout,) -> (CMAX, 9*CMAX) tap-major weight, (CMAX,1) bias."""
    cin, cout = w_hwio.shape[2], w_hwio.shape[3]
    w = jnp.pad(w_hwio, ((0, 0), (0, 0), (0, CMAX - cin), (0, CMAX - cout)))
    w = w.reshape(9, CMAX, CMAX)                       # (tap, cin, cout)
    if not roll_numpy_like:                            # adapt taps to roll convention
        w = w[::-1]
    w = jnp.transpose(w, (2, 0, 1)).reshape(CMAX, 9 * CMAX)
    b = jnp.pad(bias, (0, CMAX - cout)).reshape(CMAX, 1)
    return w, b


def pack_params(params):
    """One-time (non-jitted) repack of every static weight for the fused kernel."""
    rnl = _roll_is_numpy_like()
    blocks = list(params["res"]) + [params["final_res"]]

    wcs, bcs = [], []
    w0, b0 = _pack_conv(params["init_conv"]["w"], params["init_conv"]["b"], rnl)
    wcs.append(w0); bcs.append(b0)
    for bp in blocks:
        for cname in ("conv1", "conv2"):
            wci, bci = _pack_conv(bp[cname]["w"], bp[cname]["b"], rnl)
            wcs.append(wci); bcs.append(bci)
    wf, bf = _pack_conv(params["final_conv"]["w"], params["final_conv"]["b"], rnl)
    wcs.append(wf); bcs.append(bf)

    return {
        "mask": jnp.asarray(_build_mask()),
        "wc": jnp.stack(wcs),                                        # (NCONV, 8, 72)
        "bc": jnp.stack(bcs),                                        # (NCONV, 8, 1)
        # BN2 affine (no FiLM on norm_2)
        "a2": jnp.stack([bp["bn2"]["g"].reshape(CMAX, 1) for bp in blocks]),
        "c2": jnp.stack([bp["bn2"]["b"].reshape(CMAX, 1) for bp in blocks]),
        # BN1 affine kept raw; folded with the per-call FiLM in the wrapper
        "g1": jnp.stack([bp["bn1"]["g"] for bp in blocks]),          # (NBLK, 8)
        "be1": jnp.stack([bp["bn1"]["b"] for bp in blocks]),         # (NBLK, 8)
        "mlp_w": jnp.stack([bp["mlp"]["w"] for bp in blocks]),       # (NBLK, 16, 32)
        "mlp_b": jnp.stack([bp["mlp"]["b"] for bp in blocks]),       # (NBLK, 16)
        "tm1_w": params["tm1"]["w"], "tm1_b": params["tm1"]["b"],
        "tm2_w": params["tm2"]["w"], "tm2_b": params["tm2"]["b"],
    }


def _pack_input(x_nchw):
    """NCHW (B, IN_CH, H, W) -> channels-first flattened padded layout (CMAX, REG)."""
    x = x_nchw.astype(jnp.float32)
    x = jnp.pad(x, ((0, 0), (0, CMAX - IN_CH), (1, 1), (1, 1)))   # (B, 8, 18, 18)
    x = x.reshape(B, CMAX, SPAD)
    x = jnp.pad(x, ((0, 0), (0, 0), (0, SPB - SPAD)))             # (B, 8, 384)
    return jnp.transpose(x, (1, 0, 2)).reshape(CMAX, REG)


def _unpack_output(y):
    """(CMAX, REG) lane-dense kernel output -> NCHW (B, OUT_DIM, H, W)."""
    y = y[:OUT_DIM].reshape(OUT_DIM, B, SPB)[:, :, :SPAD]
    y = y.reshape(OUT_DIM, B, SPH, SPW)[:, :, 1:1 + H, 1:1 + W]
    return jnp.transpose(y, (1, 0, 2, 3))


# ------------------------- model (forward pass) ----------------------------
def _time_mlp(packed, t):
    # SinusoidalPosEmb(dim) -> Linear(dim, 4*dim) -> GELU(exact) -> Linear(4*dim, 4*dim)
    half = DIM // 2
    emb = math.log(10000.0) / (half - 1)
    freqs = jnp.exp(jnp.arange(half, dtype=jnp.float32) * -emb)
    e = t[:, None] * freqs[None, :]
    e = jnp.concatenate([jnp.sin(e), jnp.cos(e)], axis=-1)          # (B, DIM)
    h = e @ packed["tm1_w"].T + packed["tm1_b"]
    h = jax.nn.gelu(h, approximate=False)                           # nn.GELU() exact
    return h @ packed["tm2_w"].T + packed["tm2_b"]                  # (B, TIME_DIM)


def pred_resnet_fwd(packed, coarse_img_01, coarse_img_02, fine_img_01,
                    noisy_fine_img_02, time):
    x = jnp.concatenate([coarse_img_01, coarse_img_02, fine_img_01,
                         noisy_fine_img_02], axis=1)                # (B, IN_CH, H, W)
    xp = _pack_input(x)

    t = _time_mlp(packed, time)                                     # (B, TIME_DIM)
    tr = jnp.maximum(t, 0.0)                                        # block mlp: ReLU
    temb = (jnp.einsum("bt,kct->kbc", tr, packed["mlp_w"])
            + packed["mlp_b"][:, None, :])                          # (NBLK, B, 2*DIM)
    scale, shift = jnp.split(temb, 2, axis=-1)                      # (NBLK, B, DIM)

    # fold BN1 affine with FiLM:  xn*(g1*(s+1)) + (be1*(s+1)+shift)
    a1 = packed["g1"][:, None, :] * (scale + 1.0)                   # (NBLK, B, DIM)
    c1 = packed["be1"][:, None, :] * (scale + 1.0) + shift

    def film_map(v):   # (NBLK, B, DIM) -> per-lane (NBLK, CMAX, REG)
        v = jnp.transpose(v, (0, 2, 1))                             # (NBLK, DIM, B)
        v = jnp.broadcast_to(v[:, :, :, None], (NBLK, CMAX, B, SPB))
        return v.reshape(NBLK, CMAX, REG)

    y = _fused_forward(xp, packed["mask"], packed["wc"], packed["bc"],
                       film_map(a1), film_map(c1), packed["a2"], packed["c2"])
    return _unpack_output(y)


# --------------------------- parameter init --------------------------------
def init_params(key):
    keys = iter(jax.random.split(key, 64))

    def nrm(shape, s):
        return s * jax.random.normal(next(keys), shape, dtype=jnp.float32)

    def conv_p(cin, cout):
        return {"w": nrm((3, 3, cin, cout), 1.0 / math.sqrt(9 * cin)),  # HWIO
                "b": nrm((cout,), 0.02)}

    def lin_p(din, dout):
        return {"w": nrm((dout, din), 1.0 / math.sqrt(din)),            # (out, in)
                "b": nrm((dout,), 0.02)}

    def bn_p(c):
        return {"g": 1.0 + nrm((c,), 0.1), "b": nrm((c,), 0.1)}

    def block_p(cin, cout):
        return {"mlp": lin_p(TIME_DIM, 2 * cout),
                "conv1": conv_p(cin, cout), "bn1": bn_p(cout),
                "conv2": conv_p(cout, cout), "bn2": bn_p(cout)}

    return {
        "init_conv": conv_p(IN_CH, DIM),
        "tm1": lin_p(DIM, TIME_DIM),
        "tm2": lin_p(TIME_DIM, TIME_DIM),
        "res": [block_p(DIM, DIM) for _ in range(DEPTH)],
        "final_res": block_p(DIM, DIM),
        "final_conv": conv_p(DIM, OUT_DIM),
    }


# -------------------------------- main --------------------------------------
if __name__ == "__main__":
    key = jax.random.PRNGKey(0)
    kp, k1, k2, k3, k4, kt = jax.random.split(key, 6)
    params = init_params(kp)
    packed = pack_params(params)        # one-time packing (includes roll probe)

    img_shape = (B, C_IMG, H, W)        # NCHW, matching the PyTorch module API
    coarse_img_01 = jax.random.normal(k1, img_shape, jnp.float32)
    coarse_img_02 = jax.random.normal(k2, img_shape, jnp.float32)
    fine_img_01 = jax.random.normal(k3, img_shape, jnp.float32)
    noisy_fine_img_02 = jax.random.normal(k4, img_shape, jnp.float32)
    time_t = jax.random.uniform(kt, (B,), jnp.float32, 0.0, 1000.0)

    fwd = jax.jit(pred_resnet_fwd)
    out = fwd(packed, coarse_img_01, coarse_img_02,
              fine_img_01, noisy_fine_img_02, time_t)
    jax.block_until_ready(out)
    assert out.shape == (B, OUT_DIM, H, W) and out.dtype == jnp.float32
    print("KERNEL_OK")
</pallas_src>

<mosaic_0001>
module attributes {stable_mosaic.version = 11 : i64} {
  func.func @k(%arg0: memref<8x256xf32, #tpu.memory_space<vmem>>, %arg1: memref<8x256xf32, #tpu.memory_space<vmem>>) attributes {dimension_semantics = [], scalar_prefetch = 0 : i64, scratch_operands = 0 : i64, tpu.core_type = #tpu.core_type<tc>} {
    %c0 = arith.constant 0 : index
    %c0_0 = arith.constant 0 : index
    %0 = vector.load %arg0[%c0, %c0_0] : memref<8x256xf32, #tpu.memory_space<vmem>>, vector<8x256xf32>
    %c3_i32 = arith.constant 3 : i32
    %1 = tpu.dynamic_rotate %0 by %c3_i32 dim 1 : vector<8x256xf32>, i32 -> vector<8x256xf32>
    %c0_1 = arith.constant 0 : index
    %c0_2 = arith.constant 0 : index
    %2 = vector.load %arg1[%c0_1, %c0_2] : memref<8x256xf32, #tpu.memory_space<vmem>>, vector<8x256xf32>
    tpu.vector_store %arg1[%c0_1, %c0_2], %1 {strides = array<i32>} : memref<8x256xf32, #tpu.memory_space<vmem>>, vector<8x256xf32>,
    return
  }
}

</mosaic_0001>

<llo_original>
// kernel: tpu_custom_call.1
$region0: #{tpu_custom_call.1}
  #allocation0 [shape = 'u32[]', space=smem, size = 0x4, offset = 0x4, fixed_abs, tag = 'smem constant byte address 0x4 - core index']
  #allocation1 [shape = 'u32[144,128]{1,0:T(1,128)}', space=vmem, size = 0x12000, scoped, tag = 'internal scratch']
  %s0 = inlined_call_operand.hbm [shape: f32[8,256], index: 0, kind: input, shape index: {}]
  %s1 = inlined_call_operand.hbm [shape: f32[8,256], index: 1, kind: output, shape index: {}]
  %s2 = sld [smem:[#allocation0]]
  $region18: #{tpu_custom_call.1} parent=0
    _
  %s4 = ssub.s32 1, %s2
  %s5 = scalar_select 0, %s4, %s2
  $region1: #{tpu_custom_call.1} parent=0
    #allocation2 [shape = 'u8[8192]{0}', space=vmem, size = 0x2000, scoped, tag = 'input window, operand 0, single buffered']
    #allocation3 [shape = 's32[1]{0}', space=sflag, size = 0x4, scoped, tag = 'scoped memory for tpu_custom_call.1']
    #allocation4 [shape = 's32[1]{0}', space=sflag, size = 0x4, scoped, tag = 'scoped memory for tpu_custom_call.1']
    #allocation5 [shape = 'u8[8192]{0}', space=vmem, size = 0x2000, scoped, tag = 'output window, operand 0, single buffered']
    %6 = vsyncpa [#allocation3], 0
    %7 = vsyncpa [#allocation4], 0
    // Predicated region
    $region2: #{tpu_custom_call.1} parent=1 // pred_check
      _
    $region3: #{tpu_custom_call.1} parent=1 // pred_check_branch
      %9 = sbr.rel (0) target = $region5
    $region4: #{tpu_custom_call.1} parent=1 // pred_region
      %s11 = ssub.s32 256, 256
      %12 = vsyncadd [#allocation3], %s11
      %s14 = sshll.u32 [#allocation2], 4
      %s15 = int_to_ptr.vmem [resolvable:$true] %s14
      %17 = dma.hbm_to_vmem [thread:$0]  %s0, 256, %s15, [#allocation3]
    $region5: #{tpu_custom_call.1} parent=1 // pred_fallthru
      _
    // Predicated region
    $region6: #{tpu_custom_call.1} parent=1 // pred_check
      _
    $region7: #{tpu_custom_call.1} parent=1 // pred_check_branch
      %19 = sbr.rel (0) target = $region9
    $region8: #{tpu_custom_call.1} parent=1 // pred_region
      %20 = dma.done [#allocation3], 256
    $region9: #{tpu_custom_call.1} parent=1 // pred_fallthru
      _
    %v21 = vld [vmem:[#allocation2] sm:$0xff]
    %v22 = vld [vmem:[#allocation2 + $0x8] sm:$0xff]
    %23 = vrot.lane.b32.xlu0 %v21, 3
    %v24 = vpop.permute.xlu0 %23
    %25 = vrot.lane.b32.xlu0 %v22, 3
    %v26 = vpop.permute.xlu0 %25
    %v27 = vlaneseq
    %v28 = vand.u32 %v27, 127
    %vm29 = vcmp.lt.s32.totalorder %v28, 3
    %v30 = vsel %vm29, %v24, %v26
    %v31 = vsel %vm29, %v26, %v24
    %32 = vst [vmem:[#allocation5] sm:$0xff] %v31
    %33 = vst [vmem:[#allocation5 + $0x8] sm:$0xff] %v30
    // Predicated region
    $region10: #{tpu_custom_call.1} parent=1 // pred_check
      _
    $region11: #{tpu_custom_call.1} parent=1 // pred_check_branch
      %35 = sbr.rel (0) target = $region13
    $region12: #{tpu_custom_call.1} parent=1 // pred_region
      %s37 = ssub.s32 256, 256
      %38 = vsyncadd [#allocation4], %s37
      %s40 = sshll.u32 [#allocation5], 4
      %s41 = int_to_ptr.vmem [resolvable:$true] %s40
      %43 = dma.vmem_to_hbm [thread:$0]  %s41, 256, %s1, [#allocation4]
    $region13: #{tpu_custom_call.1} parent=1 // pred_fallthru
      _
    // Predicated region
    $region14: #{tpu_custom_call.1} parent=1 // pred_check
      _
    $region15: #{tpu_custom_call.1} parent=1 // pred_check_branch
      %45 = sbr.rel (0) target = $region17
    $region16: #{tpu_custom_call.1} parent=1 // pred_region
      %46 = dma.done [#allocation4], 256
    $region17: #{tpu_custom_call.1} parent=1 // pred_fallthru
      _
    %47 = vsyncpa [#allocation3], 1
    %48 = vsyncpa [#allocation4], 1

</llo_original>
